<compile_context>
chip_gen: v7x
topology: tpu7x:2x2x1
jax: 0.10.0
libtpu: 0.0.40
codegen_flags: <defaults>
</compile_context>

<pallas_src>
import jax
import jax.numpy as jnp
from jax import lax
from jax.experimental import pallas as pl
from jax.experimental.pallas import tpu as pltpu


def _round_up(x: int, m: int) -> int:
    return ((x + m - 1) // m) * m


def _cdiv(a: int, b: int) -> int:
    return (a + b - 1) // b


def _choose_tiles(batch: int, tile_b_cap: int = 2048, split_rows: int = 1024):
    """Pick (TILE_B, num_tiles).

    TILE_B is a multiple of 8 (sublane granule).  Batches large enough to be worth
    splitting get an even number of tiles so the "parallel" batch axis load-balances
    across v7x's two TensorCores (no-op on v5e/v6e).  Tiny batches collapse to one
    tile.  Ragged tails are handled by Pallas partial blocks (no host-side padding).
    """
    b8 = _round_up(batch, 8)
    num_tiles = _cdiv(b8, tile_b_cap)
    if b8 > split_rows:
        num_tiles = max(num_tiles, 2)
        if num_tiles % 2:
            num_tiles += 1
    tile_b = _round_up(_cdiv(b8, num_tiles), 8)
    num_tiles = _cdiv(batch, tile_b)
    return tile_b, num_tiles


def critic_mlp_kernel(x_ref, w1_ref, b1_ref, w2_ref, b2_ref, w3_ref, b3_ref,
                      out_ref):
    """One batch tile: x (TILE_B, S) f32 -> value row (1, TILE_B) f32."""
    # Layer 1: MXU matmul (f32, f32 accumulation) + bias + ReLU.
    h = jnp.dot(x_ref[...], w1_ref[...],
                preferred_element_type=jnp.float32) + b1_ref[...]
    h = jnp.maximum(h, 0.0)
    # Layer 2: same pattern.
    h = jnp.dot(h, w2_ref[...],
                preferred_element_type=jnp.float32) + b2_ref[...]
    h = jnp.maximum(h, 0.0)
    # Value head (out_features == 1): contract w3 (1, D1) with h (TILE_B, D1) on the
    # last dims (q@k^T pattern) so the result is natively lane-dense: (1, TILE_B).
    v = lax.dot_general(w3_ref[...], h,
                        dimension_numbers=(((1,), (1,)), ((), ())),
                        preferred_element_type=jnp.float32)
    out_ref[...] = v + b3_ref[0, 0]          # b3 scalar from SMEM


def critic_ppo_forward(state, params, *, tile_b_cap: int = 2048):
    """state: [B, state_dim] float32; params: dict of w1,b1,w2,b2,w3,b3 (f32).

    Returns the critic value, shape [B, 1] float32.
    """
    B, S = state.shape
    D0 = params["w1"].shape[1]
    D1 = params["w2"].shape[1]

    TILE_B, num_tiles = _choose_tiles(B, tile_b_cap)

    w1 = params["w1"]                        # (S, D0)  f32, VMEM-resident
    b1 = params["b1"]                        # (1, D0)
    w2 = params["w2"]                        # (D0, D1)
    b2 = params["b2"]                        # (1, D1)
    w3 = params["w3"].reshape(1, D1)         # row vector (1, D1)
    b3 = params["b3"].reshape(1, 1)          # scalar, goes to SMEM

    _const2 = lambda i: (0, 0)               # weights/biases resident across tiles

    flops = 2 * B * (S * D0 + D0 * D1 + D1)
    bytes_accessed = 4 * (state.size + w1.size + b1.size + w2.size + b2.size
                          + w3.size + b3.size + B)

    out = pl.pallas_call(
        critic_mlp_kernel,
        out_shape=jax.ShapeDtypeStruct((num_tiles, 1, TILE_B), jnp.float32),
        grid=(num_tiles,),
        in_specs=[
            pl.BlockSpec((TILE_B, S), lambda i: (i, 0)),        # batch-tiled state
            pl.BlockSpec((S, D0), _const2),                     # W1 (resident)
            pl.BlockSpec((1, D0), _const2),                     # b1
            pl.BlockSpec((D0, D1), _const2),                    # W2
            pl.BlockSpec((1, D1), _const2),                     # b2
            pl.BlockSpec((1, D1), _const2),                     # w3 row
            pl.BlockSpec(memory_space=pltpu.MemorySpace.SMEM),  # b3 scalar
        ],
        # Lane-dense value row per tile; leading (tile) dim squeezed out of the ref.
        out_specs=pl.BlockSpec((None, 1, TILE_B), lambda i: (i, 0, 0)),
        compiler_params=pltpu.CompilerParams(
            dimension_semantics=("parallel",),
            vmem_limit_bytes=32 * 1024 * 1024),
        cost_estimate=pl.CostEstimate(
            flops=int(flops), transcendentals=0,
            bytes_accessed=int(bytes_accessed)),
    )(state, w1, b1, w2, b2, w3, b3)

    # (num_tiles, 1, TILE_B) -> [B, 1]; rows >= B (ragged tail) are discarded here.
    return out.reshape(num_tiles * TILE_B, 1)[:B]


def init_params(key, state_dim, dims):
    """Deterministic init mirroring PyTorch Linear's U(-1/sqrt(fan_in), +...)."""
    layer_dims = [state_dim, *dims, 1]
    params = {}
    keys = jax.random.split(key, 2 * (len(layer_dims) - 1))
    for i in range(len(layer_dims) - 1):
        fan_in, fan_out = layer_dims[i], layer_dims[i + 1]
        bound = 1.0 / jnp.sqrt(float(fan_in))
        params[f"w{i + 1}"] = jax.random.uniform(
            keys[2 * i], (fan_in, fan_out), minval=-bound, maxval=bound,
            dtype=jnp.float32)
        params[f"b{i + 1}"] = jax.random.uniform(
            keys[2 * i + 1], (1, fan_out), minval=-bound, maxval=bound,
            dtype=jnp.float32)
    return params


def reference_forward_f32(state, params):
    """Pure-f32 JAX reference of the module (PyTorch semantics)."""
    h = jnp.maximum(state @ params["w1"] + params["b1"], 0.0)
    h = jnp.maximum(h @ params["w2"] + params["b2"], 0.0)
    return h @ params["w3"] + params["b3"]


if __name__ == "__main__":
    STATE_DIM = 16
    DIMS = [32, 32]   # CriticPPO(dims=[32, 32], state_dim=16, _action_dim=4)

    key = jax.random.PRNGKey(0)
    k_state, k_params, k_big = jax.random.split(key, 3)
    params = init_params(k_params, STATE_DIM, DIMS)

    fwd = jax.jit(critic_ppo_forward)

    # Small-shape check (B=2): single partial tile, grid=(1,).
    state = jax.random.normal(k_state, (2, STATE_DIM), dtype=jnp.float32)
    out = jax.block_until_ready(fwd(state, params))
    assert out.shape == (2, 1), out.shape
    assert jnp.allclose(out, reference_forward_f32(state, params),
                        atol=1e-2, rtol=1e-2)

    # Larger batch exercises the multi-tile grid with a ragged tail (2 tiles of 520).
    state_big = jax.random.normal(k_big, (1029, STATE_DIM), dtype=jnp.float32)
    out_big = jax.block_until_ready(fwd(state_big, params))
    assert out_big.shape == (1029, 1), out_big.shape
    assert jnp.allclose(out_big, reference_forward_f32(state_big, params),
                        atol=1e-2, rtol=1e-2)

    print("KERNEL_OK")
</pallas_src>

<mosaic_0001>
module attributes {stable_mosaic.version = 11 : i64} {
  func.func @critic_mlp_kernel(%arg0: i32, %arg1: memref<8x16xf32, #tpu.memory_space<vmem>>, %arg2: memref<16x32xf32, #tpu.memory_space<vmem>>, %arg3: memref<1x32xf32, #tpu.memory_space<vmem>>, %arg4: memref<32x32xf32, #tpu.memory_space<vmem>>, %arg5: memref<1x32xf32, #tpu.memory_space<vmem>>, %arg6: memref<1x32xf32, #tpu.memory_space<vmem>>, %arg7: memref<1x1xf32, #tpu.memory_space<smem>>, %arg8: memref<1x1x8xf32, #tpu.memory_space<vmem>>) attributes {dimension_semantics = [#tpu.dimension_semantics<parallel>], iteration_bounds = array<i64: 1>, scalar_prefetch = 0 : i64, scratch_operands = 0 : i64, tpu.core_type = #tpu.core_type<tc>, window_params = [{transform_indices = @transform_0, window_bounds = array<i64: 8, 16>}, {pipeline_mode = #tpu.pipeline_mode<synchronous>, transform_indices = @transform_1, window_bounds = array<i64: 16, 32>}, {pipeline_mode = #tpu.pipeline_mode<synchronous>, transform_indices = @transform_2, window_bounds = array<i64: 1, 32>}, {pipeline_mode = #tpu.pipeline_mode<synchronous>, transform_indices = @transform_3, window_bounds = array<i64: 32, 32>}, {pipeline_mode = #tpu.pipeline_mode<synchronous>, transform_indices = @transform_4, window_bounds = array<i64: 1, 32>}, {pipeline_mode = #tpu.pipeline_mode<synchronous>, transform_indices = @transform_5, window_bounds = array<i64: 1, 32>}, {transform_indices = @transform_6, window_bounds = array<i64: 1, 1>}, {transform_indices = @transform_7, window_bounds = array<i64: 1, 1, 8>}]} {
    %c0 = arith.constant 0 : index
    %c0_0 = arith.constant 0 : index
    %0 = vector.load %arg1[%c0, %c0_0] : memref<8x16xf32, #tpu.memory_space<vmem>>, vector<8x16xf32>
    %c0_1 = arith.constant 0 : index
    %c0_2 = arith.constant 0 : index
    %1 = vector.load %arg2[%c0_1, %c0_2] : memref<16x32xf32, #tpu.memory_space<vmem>>, vector<16x32xf32>
    %cst = arith.constant dense<0.000000e+00> : vector<8x32xf32>
    %2 = tpu.matmul %0, %1, %cst {dimension_numbers = #tpu.dot_dimension_numbers<[1], [0], [0], [1], [0, 0, 1, 1], [], []>} : vector<8x16xf32>, vector<16x32xf32>, vector<8x32xf32> -> vector<8x32xf32>
    %c0_3 = arith.constant 0 : index
    %c0_4 = arith.constant 0 : index
    %3 = vector.load %arg3[%c0_3, %c0_4] : memref<1x32xf32, #tpu.memory_space<vmem>>, vector<1x32xf32>
    %4 = vector.broadcast %3 : vector<1x32xf32> to vector<8x32xf32>
    %5 = arith.addf %2, %4 : vector<8x32xf32>
    %cst_5 = arith.constant 0.000000e+00 : f32
    %6 = vector.broadcast %cst_5 : f32 to vector<8x32xf32>
    %7 = arith.maximumf %5, %6 : vector<8x32xf32>
    %c0_6 = arith.constant 0 : index
    %c0_7 = arith.constant 0 : index
    %8 = vector.load %arg4[%c0_6, %c0_7] : memref<32x32xf32, #tpu.memory_space<vmem>>, vector<32x32xf32>
    %cst_8 = arith.constant dense<0.000000e+00> : vector<8x32xf32>
    %9 = tpu.matmul %7, %8, %cst_8 {dimension_numbers = #tpu.dot_dimension_numbers<[1], [0], [0], [1], [0, 0, 1, 1], [], []>} : vector<8x32xf32>, vector<32x32xf32>, vector<8x32xf32> -> vector<8x32xf32>
    %c0_9 = arith.constant 0 : index
    %c0_10 = arith.constant 0 : index
    %10 = vector.load %arg5[%c0_9, %c0_10] : memref<1x32xf32, #tpu.memory_space<vmem>>, vector<1x32xf32>
    %11 = vector.broadcast %10 : vector<1x32xf32> to vector<8x32xf32>
    %12 = arith.addf %9, %11 : vector<8x32xf32>
    %cst_11 = arith.constant 0.000000e+00 : f32
    %13 = vector.broadcast %cst_11 : f32 to vector<8x32xf32>
    %14 = arith.maximumf %12, %13 : vector<8x32xf32>
    %c0_12 = arith.constant 0 : index
    %c0_13 = arith.constant 0 : index
    %15 = vector.load %arg6[%c0_12, %c0_13] : memref<1x32xf32, #tpu.memory_space<vmem>>, vector<1x32xf32>
    %cst_14 = arith.constant dense<0.000000e+00> : vector<1x8xf32>
    %16 = tpu.matmul %15, %14, %cst_14 {dimension_numbers = #tpu.dot_dimension_numbers<[1], [1], [0], [0], [0, 0, 1, 0], [], []>} : vector<1x32xf32>, vector<8x32xf32>, vector<1x8xf32> -> vector<1x8xf32>
    %c0_15 = arith.constant 0 : index
    %c0_16 = arith.constant 0 : index
    %17 = memref.load %arg7[%c0_15, %c0_16] : memref<1x1xf32, #tpu.memory_space<smem>>
    %18 = vector.broadcast %17 : f32 to vector<1x8xf32>
    %19 = arith.addf %16, %18 : vector<1x8xf32>
    %c0_17 = arith.constant 0 : index
    %c0_18 = arith.constant 0 : index
    %c0_19 = arith.constant 0 : index
    %20 = vector.load %arg8[%c0_17, %c0_18, %c0_19] : memref<1x1x8xf32, #tpu.memory_space<vmem>>, vector<1x1x8xf32>
    %21 = vector.shape_cast %20 : vector<1x1x8xf32> to vector<1x8xf32>
    %22 = vector.shape_cast %19 : vector<1x8xf32> to vector<1x1x8xf32>
    tpu.vector_store %arg8[%c0_17, %c0_18, %c0_19], %22 {strides = array<i32>} : memref<1x1x8xf32, #tpu.memory_space<vmem>>, vector<1x1x8xf32>,
    return
  }
  func.func @transform_0(%arg0: i32) -> (i32, i32) {
    %c0_i32 = arith.constant 0 : i32
    %c0_i32_0 = arith.constant 0 : i32
    return %arg0, %c0_i32 : i32, i32
  }
  func.func @transform_1(%arg0: i32) -> (i32, i32) {
    %c0_i32 = arith.constant 0 : i32
    %c0_i32_0 = arith.constant 0 : i32
    %c0_i32_1 = arith.constant 0 : i32
    return %c0_i32, %c0_i32_0 : i32, i32
  }
  func.func @transform_2(%arg0: i32) -> (i32, i32) {
    %c0_i32 = arith.constant 0 : i32
    %c0_i32_0 = arith.constant 0 : i32
    %c0_i32_1 = arith.constant 0 : i32
    return %c0_i32, %c0_i32_0 : i32, i32
  }
  func.func @transform_3(%arg0: i32) -> (i32, i32) {
    %c0_i32 = arith.constant 0 : i32
    %c0_i32_0 = arith.constant 0 : i32
    %c0_i32_1 = arith.constant 0 : i32
    return %c0_i32, %c0_i32_0 : i32, i32
  }
  func.func @transform_4(%arg0: i32) -> (i32, i32) {
    %c0_i32 = arith.constant 0 : i32
    %c0_i32_0 = arith.constant 0 : i32
    %c0_i32_1 = arith.constant 0 : i32
    return %c0_i32, %c0_i32_0 : i32, i32
  }
  func.func @transform_5(%arg0: i32) -> (i32, i32) {
    %c0_i32 = arith.constant 0 : i32
    %c0_i32_0 = arith.constant 0 : i32
    %c0_i32_1 = arith.constant 0 : i32
    return %c0_i32, %c0_i32_0 : i32, i32
  }
  func.func @transform_6(%arg0: i32) -> (i32, i32) {
    %c0_i32 = arith.constant 0 : i32
    %c0_i32_0 = arith.constant 0 : i32
    %c0_i32_1 = arith.constant 0 : i32
    return %c0_i32, %c0_i32_0 : i32, i32
  }
  func.func @transform_7(%arg0: i32) -> (i32, i32, i32) {
    %c0_i32 = arith.constant 0 : i32
    %c0_i32_0 = arith.constant 0 : i32
    %c0_i32_1 = arith.constant 0 : i32
    return %arg0, %c0_i32, %c0_i32_0 : i32, i32, i32
  }
}

</mosaic_0001>

<llo_original>
// kernel: critic_ppo_forward.1
$region0: #{critic_ppo_forward.1}
  #allocation0 [shape = 'u32[]', space=smem, size = 0x4, offset = 0x4, fixed_abs, tag = 'smem constant byte address 0x4 - core index']
  #allocation1 [shape = 'u32[144,128]{1,0:T(1,128)}', space=vmem, size = 0x12000, scoped, tag = 'internal scratch']
  #allocation2 [shape = 'f32[1,1]{1,0:T(1,128)S(6)}', space=smem, size = 0x200, scoped, tag = 'scoped memory for critic_ppo_forward.1']
  %s0 = inlined_call_operand.vmem [shape: f32[2,16], index: 0, kind: input, shape index: {}]
  %s1 = inlined_call_operand.vmem [shape: f32[16,32], index: 1, kind: input, shape index: {}]
  %s2 = inlined_call_operand.hbm [shape: f32[1,32], index: 2, kind: input, shape index: {}]
  %s3 = inlined_call_operand.hbm [shape: f32[32,32], index: 3, kind: input, shape index: {}]
  %s4 = inlined_call_operand.hbm [shape: f32[1,32], index: 4, kind: input, shape index: {}]
  %s5 = inlined_call_operand.vmem [shape: f32[1,32], index: 5, kind: input, shape index: {}]
  %s6 = inlined_call_operand.<no memory space> [shape: f32[1,1], index: 6, kind: input, shape index: {}]
  %s7 = inlined_call_operand.vmem [shape: f32[1,1,8], index: 7, kind: output, shape index: {}]
  %s8 = sld [smem:[#allocation0]]
  $region50: #{critic_ppo_forward.1} parent=0
    _
  %s10 = ssub.s32 1, %s8
  %s11 = scalar_select 0, %s10, %s8
  %12 = sst [smem:[#allocation2]] %s6
  $region1: #{critic_ppo_forward.1} parent=0
    #allocation3 [shape = 'u8[512]{0}', space=vmem, size = 0x400, scoped, tag = 'input window, operand 2, single buffered']
    #allocation4 [shape = 's32[1]{0}', space=sflag, size = 0x4, scoped, tag = 'scoped memory for critic_ppo_forward.1']
    #allocation5 [shape = 'u8[16384]{0}', space=vmem, size = 0x4000, scoped, tag = 'input window, operand 3, single buffered']
    #allocation6 [shape = 's32[1]{0}', space=sflag, size = 0x4, scoped, tag = 'scoped memory for critic_ppo_forward.1']
    #allocation7 [shape = 'u8[512]{0}', space=vmem, size = 0x400, scoped, tag = 'input window, operand 4, single buffered']
    %13 = vsyncpa [#allocation4], 0
    %14 = vsyncpa [#allocation6], 0
    // Predicated region
    $region2: #{critic_ppo_forward.1} parent=1 // pred_check
      _
    $region3: #{critic_ppo_forward.1} parent=1 // pred_check_branch
      %16 = sbr.rel (0) target = $region5
    $region4: #{critic_ppo_forward.1} parent=1 // pred_region
      _
    $region5: #{critic_ppo_forward.1} parent=1 // pred_fallthru
      _
    // Predicated region
    $region6: #{critic_ppo_forward.1} parent=1 // pred_check
      _
    $region7: #{critic_ppo_forward.1} parent=1 // pred_check_branch
      %18 = sbr.rel (0) target = $region9
    $region8: #{critic_ppo_forward.1} parent=1 // pred_region
      _
    $region9: #{critic_ppo_forward.1} parent=1 // pred_fallthru
      _
    // Predicated region
    $region10: #{critic_ppo_forward.1} parent=1 // pred_check
      _
    $region11: #{critic_ppo_forward.1} parent=1 // pred_check_branch
      %20 = sbr.rel (0) target = $region13
    $region12: #{critic_ppo_forward.1} parent=1 // pred_region
      %s22 = ssub.s32 16, 16
      %23 = vsyncadd [#allocation4], %s22
      %s25 = sshll.u32 [#allocation3], 4
      %s26 = int_to_ptr.vmem [resolvable:$true] %s25
      %28 = dma.hbm_to_vmem [thread:$0]  %s2, 16, %s26, [#allocation4]
    $region13: #{critic_ppo_forward.1} parent=1 // pred_fallthru
      _
    // Predicated region
    $region14: #{critic_ppo_forward.1} parent=1 // pred_check
      _
    $region15: #{critic_ppo_forward.1} parent=1 // pred_check_branch
      %30 = sbr.rel (0) target = $region17
    $region16: #{critic_ppo_forward.1} parent=1 // pred_region
      %s32 = ssub.s32 512, 512
      %33 = vsyncadd [#allocation6], %s32
      %s34 = sshll.u32 [#allocation5], 4
      %s35 = int_to_ptr.vmem [resolvable:$true] %s34
      %40 = dma.hbm_to_vmem [thread:$0]  %s3, 512, %s35, [#allocation6], 128, 128, 8
    $region17: #{critic_ppo_forward.1} parent=1 // pred_fallthru
      _
    // Predicated region
    $region18: #{critic_ppo_forward.1} parent=1 // pred_check
      _
    $region19: #{critic_ppo_forward.1} parent=1 // pred_check_branch
      %42 = sbr.rel (0) target = $region21
    $region20: #{critic_ppo_forward.1} parent=1 // pred_region
      %s44 = ssub.s32 16, 16
      %45 = vsyncadd [#allocation6], %s44
      %s47 = sshll.u32 [#allocation7], 4
      %s48 = int_to_ptr.vmem [resolvable:$true] %s47
      %50 = dma.hbm_to_vmem [thread:$0]  %s4, 16, %s48, [#allocation6]
    $region21: #{critic_ppo_forward.1} parent=1 // pred_fallthru
      _
    // Predicated region
    $region22: #{critic_ppo_forward.1} parent=1 // pred_check
      _
    $region23: #{critic_ppo_forward.1} parent=1 // pred_check_branch
      %52 = sbr.rel (0) target = $region25
    $region24: #{critic_ppo_forward.1} parent=1 // pred_region
      _
    $region25: #{critic_ppo_forward.1} parent=1 // pred_fallthru
      _
    // Predicated region
    $region26: #{critic_ppo_forward.1} parent=1 // pred_check
      _
    $region27: #{critic_ppo_forward.1} parent=1 // pred_check_branch
      %54 = sbr.rel (0) target = $region29
    $region28: #{critic_ppo_forward.1} parent=1 // pred_region
      _
    $region29: #{critic_ppo_forward.1} parent=1 // pred_fallthru
      _
    // Predicated region
    $region30: #{critic_ppo_forward.1} parent=1 // pred_check
      _
    $region31: #{critic_ppo_forward.1} parent=1 // pred_check_branch
      %56 = sbr.rel (0) target = $region33
    $region32: #{critic_ppo_forward.1} parent=1 // pred_region
      %57 = dma.done [#allocation4], 16
    $region33: #{critic_ppo_forward.1} parent=1 // pred_fallthru
      _
    // Predicated region
    $region34: #{critic_ppo_forward.1} parent=1 // pred_check
      _
    $region35: #{critic_ppo_forward.1} parent=1 // pred_check_branch
      %59 = sbr.rel (0) target = $region37
    $region36: #{critic_ppo_forward.1} parent=1 // pred_region
      %60 = dma.done [#allocation6], 512
    $region37: #{critic_ppo_forward.1} parent=1 // pred_fallthru
      _
    // Predicated region
    $region38: #{critic_ppo_forward.1} parent=1 // pred_check
      _
    $region39: #{critic_ppo_forward.1} parent=1 // pred_check_branch
      %62 = sbr.rel (0) target = $region41
    $region40: #{critic_ppo_forward.1} parent=1 // pred_region
      %63 = dma.done [#allocation6], 16
    $region41: #{critic_ppo_forward.1} parent=1 // pred_fallthru
      _
    %v64 = vld [vmem:[%s0] sm:$0xff]
    %v65 = vld [vmem:[%s1] sm:$0xff]
    %v66 = vld [vmem:[%s1 + $0x8] sm:$0xff]
    %v67 = vld [vmem:[#allocation3] sm:$0x1]
    %v69 = vlaneseq
    %v70 = vshrl.u32 %v69, 7
    %v71 = vsub.s32 0, %v70
    %v72 = vrot.slane %v67, %v71
    %vm74 = vcmask 130048
    %v76 = vsel %vm74, %v64, 0
    %78 = vmatprep.subr.mxu0 0.0
    %79 = vmatpush1.msra.mxu0 %v65
    %80 = vmatprep.subr.mxu0 0.0
    %81 = vmatpush1.msra.mxu0 %v66
    %82 = vmatprep.subr.mxu0 0.0
    %83 = vmatpush1.msra.mxu0 0.0
    %84 = vmatprep.subr.mxu0 0.0
    %85 = vmatpush1.msra.mxu0 0.0
    %86 = vmatprep.subr.mxu0 0.0
    %87 = vmatpush1.msra.mxu0 0.0
    %88 = vmatprep.subr.mxu0 0.0
    %89 = vmatpush1.msra.mxu0 0.0
    %90 = vmatprep.subr.mxu0 0.0
    %91 = vmatpush1.msra.mxu0 0.0
    %92 = vmatprep.subr.mxu0 0.0
    %93 = vmatpush1.msra.mxu0 0.0
    %94 = vmatprep.subr.mxu0 0.0
    %95 = vmatpush1.msra.mxu0 0.0
    %96 = vmatprep.subr.mxu0 0.0
    %97 = vmatpush1.msra.mxu0 0.0
    %98 = vmatprep.subr.mxu0 0.0
    %99 = vmatpush1.msra.mxu0 0.0
    %100 = vmatprep.subr.mxu0 0.0
    %101 = vmatpush1.msra.mxu0 0.0
    %102 = vmatprep.subr.mxu0 0.0
    %103 = vmatpush1.msra.mxu0 0.0
    %104 = vmatprep.subr.mxu0 0.0
    %105 = vmatpush1.msra.mxu0 0.0
    %106 = vmatprep.subr.mxu0 0.0
    %107 = vmatpush1.msra.mxu0 0.0
    %108 = vmatprep.subr.mxu0 0.0
    %109 = vmatpush1.msra.mxu0 0.0
    %110 = vmatprep.subr.mxu0 0.0
    %111 = vmatpush1.msra.mxu0 0.0
    %112 = vmatprep.subr.mxu0 0.0
    %113 = vmatpush1.msra.mxu0 0.0
    %114 = vmatprep.subr.mxu0 0.0
    %115 = vmatpush1.msra.mxu0 0.0
    %116 = vmatprep.subr.mxu0 0.0
    %117 = vmatpush1.msra.mxu0 0.0
    %118 = vmatprep.subr.mxu0 0.0
    %119 = vmatpush1.msra.mxu0 0.0
    %120 = vmatprep.subr.mxu0 0.0
    %121 = vmatpush1.msra.mxu0 0.0
    %122 = vmatprep.subr.mxu0 0.0
    %123 = vmatpush1.msra.mxu0 0.0
    %124 = vmatprep.subr.mxu0 0.0
    %125 = vmatpush1.msra.mxu0 0.0
    %126 = vmatprep.subr.mxu0 0.0
    %127 = vmatpush1.msra.mxu0 0.0
    %128 = vmatprep.subr.mxu0 0.0
    %129 = vmatpush1.msra.mxu0 0.0
    %130 = vmatprep.subr.mxu0 0.0
    %131 = vmatpush1.msra.mxu0 0.0
    %132 = vmatprep.subr.mxu0 0.0
    %133 = vmatpush1.msra.mxu0 0.0
    %134 = vmatprep.subr.mxu0 0.0
    %135 = vmatpush1.msra.mxu0 0.0
    %136 = vmatprep.subr.mxu0 0.0
    %137 = vmatpush1.msra.mxu0 0.0
    %138 = vmatprep.subr.mxu0 0.0
    %139 = vmatpush1.msra.mxu0 0.0
    %140 = vmatprep.subr.mxu0 0.0
    %141 = vmatpush1.msra.mxu0 0.0
    %142 = vmatprep.mubr.f32.mxu0 0.0
    %143 = vmatmul.mubr.f32.gmra.mrb[0].mxu0 %v76
    %v144 = vpop.f32.mrb[0].mxu0
    %v145 = vadd.f32 %v72, %v144
    %v146 = vpop.f32.mrb[0].mxu0
    %147 = vdwg.mxu0
    %v148 = vmax.f32 %v145, 0.0
    %v149 = vld [vmem:[#allocation5] sm:$0xff]
    %v150 = vld [vmem:[#allocation5 + $0x8] sm:$0xff]
    %v151 = vld [vmem:[#allocation5 + $0x10] sm:$0xff]
    %v152 = vld [vmem:[#allocation5 + $0x18] sm:$0xff]
    %v153 = vld [vmem:[#allocation7] sm:$0x1]
    %v155 = vlaneseq
    %v156 = vshrl.u32 %v155, 7
    %v157 = vsub.s32 0, %v156
    %v158 = vrot.slane %v153, %v157
    %vm160 = vcmask 261120
    %v162 = vsel %vm160, %v148, 0
    %164 = vmatprep.subr.mxu0 0.0
    %165 = vmatpush1.msra.mxu0 %v149
    %166 = vmatprep.subr.mxu0 0.0
    %167 = vmatpush1.msra.mxu0 %v150
    %168 = vmatprep.subr.mxu0 0.0
    %169 = vmatpush1.msra.mxu0 %v151
    %170 = vmatprep.subr.mxu0 0.0
    %171 = vmatpush1.msra.mxu0 %v152
    %172 = vmatprep.subr.mxu0 0.0
    %173 = vmatpush1.msra.mxu0 0.0
    %174 = vmatprep.subr.mxu0 0.0
    %175 = vmatpush1.msra.mxu0 0.0
    %176 = vmatprep.subr.mxu0 0.0
    %177 = vmatpush1.msra.mxu0 0.0
    %178 = vmatprep.subr.mxu0 0.0
    %179 = vmatpush1.msra.mxu0 0.0
    %180 = vmatprep.subr.mxu0 0.0
    %181 = vmatpush1.msra.mxu0 0.0
    %182 = vmatprep.subr.mxu0 0.0
    %183 = vmatpush1.msra.mxu0 0.0
    %184 = vmatprep.subr.mxu0 0.0
    %185 = vmatpush1.msra.mxu0 0.0
    %186 = vmatprep.subr.mxu0 0.0
    %187 = vmatpush1.msra.mxu0 0.0
    %188 = vmatprep.subr.mxu0 0.0
    %189 = vmatpush1.msra.mxu0 0.0
    %190 = vmatprep.subr.mxu0 0.0
    %191 = vmatpush1.msra.mxu0 0.0
    %192 = vmatprep.subr.mxu0 0.0
    %193 = vmatpush1.msra.mxu0 0.0
    %194 = vmatprep.subr.mxu0 0.0
    %195 = vmatpush1.msra.mxu0 0.0
    %196 = vmatprep.subr.mxu0 0.0
    %197 = vmatpush1.msra.mxu0 0.0
    %198 = vmatprep.subr.mxu0 0.0
    %199 = vmatpush1.msra.mxu0 0.0
    %200 = vmatprep.subr.mxu0 0.0
    %201 = vmatpush1.msra.mxu0 0.0
    %202 = vmatprep.subr.mxu0 0.0
    %203 = vmatpush1.msra.mxu0 0.0
    %204 = vmatprep.subr.mxu0 0.0
    %205 = vmatpush1.msra.mxu0 0.0
    %206 = vmatprep.subr.mxu0 0.0
    %207 = vmatpush1.msra.mxu0 0.0
    %208 = vmatprep.subr.mxu0 0.0
    %209 = vmatpush1.msra.mxu0 0.0
    %210 = vmatprep.subr.mxu0 0.0
    %211 = vmatpush1.msra.mxu0 0.0
    %212 = vmatprep.subr.mxu0 0.0
    %213 = vmatpush1.msra.mxu0 0.0
    %214 = vmatprep.subr.mxu0 0.0
    %215 = vmatpush1.msra.mxu0 0.0
    %216 = vmatprep.subr.mxu0 0.0
    %217 = vmatpush1.msra.mxu0 0.0
    %218 = vmatprep.subr.mxu0 0.0
    %219 = vmatpush1.msra.mxu0 0.0
    %220 = vmatprep.subr.mxu0 0.0
    %221 = vmatpush1.msra.mxu0 0.0
    %222 = vmatprep.subr.mxu0 0.0
    %223 = vmatpush1.msra.mxu0 0.0
    %224 = vmatprep.subr.mxu0 0.0
    %225 = vmatpush1.msra.mxu0 0.0
    %226 = vmatprep.subr.mxu0 0.0
    %227 = vmatpush1.msra.mxu0 0.0
    %228 = vmatprep.mubr.f32.mxu0 0.0
    %229 = vmatmul.mubr.f32.gmra.mrb[0].mxu0 %v162
    %v230 = vpop.f32.mrb[0].mxu0
    %v231 = vadd.f32 %v158, %v230
    %v232 = vpop.f32.mrb[0].mxu0
    %233 = vdwg.mxu0
    %v234 = vmax.f32 %v231, 0.0
    %v235 = vld [vmem:[%s5] sm:$0x1]
    %s236 = sld [smem:[#allocation2]]
    %v237 = vstv %s236
    %v239 = vsel %vm160, %v235, 0
    %v242 = vsel %vm160, %v234, 0
    %244 = vmatprep.subr.mxu0 0.0
    %245 = vmatpush1.xpose.msra.mxu0 %v242
    %246 = vmatprep.subr.mxu0 0.0
    %247 = vmatpush1.xpose.msra.mxu0 0.0
    %248 = vmatprep.subr.mxu0 0.0
    %249 = vmatpush1.xpose.msra.mxu0 0.0
    %250 = vmatprep.subr.mxu0 0.0
    %251 = vmatpush1.xpose.msra.mxu0 0.0
    %252 = vmatprep.subr.mxu0 0.0
    %253 = vmatpush1.xpose.msra.mxu0 0.0
    %254 = vmatprep.subr.mxu0 0.0
    %255 = vmatpush1.xpose.msra.mxu0 0.0
    %256 = vmatprep.subr.mxu0 0.0
    %257 = vmatpush1.xpose.msra.mxu0 0.0
    %258 = vmatprep.subr.mxu0 0.0
    %259 = vmatpush1.xpose.msra.mxu0 0.0
    %260 = vmatprep.subr.mxu0 0.0
    %261 = vmatpush1.xpose.msra.mxu0 0.0
    %262 = vmatprep.subr.mxu0 0.0
    %263 = vmatpush1.xpose.msra.mxu0 0.0
    %264 = vmatprep.subr.mxu0 0.0
    %265 = vmatpush1.xpose.msra.mxu0 0.0
    %266 = vmatprep.subr.mxu0 0.0
    %267 = vmatpush1.xpose.msra.mxu0 0.0
    %268 = vmatprep.subr.mxu0 0.0
    %269 = vmatpush1.xpose.msra.mxu0 0.0
    %270 = vmatprep.subr.mxu0 0.0
    %271 = vmatpush1.xpose.msra.mxu0 0.0
    %272 = vmatprep.subr.mxu0 0.0
    %273 = vmatpush1.xpose.msra.mxu0 0.0
    %274 = vmatprep.subr.mxu0 0.0
    %275 = vmatpush1.xpose.msra.mxu0 0.0
    %276 = vmatprep.subr.mxu0 0.0
    %277 = vmatpush1.xpose.msra.mxu0 0.0
    %278 = vmatprep.subr.mxu0 0.0
    %279 = vmatpush1.xpose.msra.mxu0 0.0
    %280 = vmatprep.subr.mxu0 0.0
    %281 = vmatpush1.xpose.msra.mxu0 0.0
    %282 = vmatprep.subr.mxu0 0.0
    %283 = vmatpush1.xpose.msra.mxu0 0.0
    %284 = vmatprep.subr.mxu0 0.0
    %285 = vmatpush1.xpose.msra.mxu0 0.0
    %286 = vmatprep.subr.mxu0 0.0
    %287 = vmatpush1.xpose.msra.mxu0 0.0
    %288 = vmatprep.subr.mxu0 0.0
    %289 = vmatpush1.xpose.msra.mxu0 0.0
    %290 = vmatprep.subr.mxu0 0.0
    %291 = vmatpush1.xpose.msra.mxu0 0.0
    %292 = vmatprep.subr.mxu0 0.0
    %293 = vmatpush1.xpose.msra.mxu0 0.0
    %294 = vmatprep.subr.mxu0 0.0
    %295 = vmatpush1.xpose.msra.mxu0 0.0
    %296 = vmatprep.subr.mxu0 0.0
    %297 = vmatpush1.xpose.msra.mxu0 0.0
    %298 = vmatprep.subr.mxu0 0.0
    %299 = vmatpush1.xpose.msra.mxu0 0.0
    %300 = vmatprep.subr.mxu0 0.0
    %301 = vmatpush1.xpose.msra.mxu0 0.0
    %302 = vmatprep.subr.mxu0 0.0
    %303 = vmatpush1.xpose.msra.mxu0 0.0
    %304 = vmatprep.subr.mxu0 0.0
    %305 = vmatpush1.xpose.msra.mxu0 0.0
    %306 = vmatprep.subr.mxu0 0.0
    %307 = vmatpush1.xpose.msra.mxu0 0.0
    %308 = vmatprep.mubr.f32.mxu0 0.0
    %309 = vmatmul.mubr.f32.gmra.mrb[0].mxu0 %v239
    %v310 = vpop.f32.mrb[0].mxu0
    %v311 = vadd.f32 %v237, %v310
    %v312 = vpop.f32.mrb[0].mxu0
    %313 = vdwg.mxu0
    %vm314 = vcmask 57344
    %315 = vst.msk [vmem:[%s7] sm:$0x1] %vm314, %v311
    // Predicated region
    $region42: #{critic_ppo_forward.1} parent=1 // pred_check
      _
    $region43: #{critic_ppo_forward.1} parent=1 // pred_check_branch
      %317 = sbr.rel (0) target = $region45
    $region44: #{critic_ppo_forward.1} parent=1 // pred_region
      _
    $region45: #{critic_ppo_forward.1} parent=1 // pred_fallthru
      _
    // Predicated region
    $region46: #{critic_ppo_forward.1} parent=1 // pred_check
      _
    $region47: #{critic_ppo_forward.1} parent=1 // pred_check_branch
      %319 = sbr.rel (0) target = $region49
    $region48: #{critic_ppo_forward.1} parent=1 // pred_region
      _
    $region49: #{critic_ppo_forward.1} parent=1 // pred_fallthru
      _
    %320 = vsyncpa [#allocation4], 1
    %321 = vsyncpa [#allocation6], 1

</llo_original>
